<compile_context>
chip_gen: v6e
topology: v6e:2x2x1
jax: 0.10.0
libtpu: 0.0.40
codegen_flags: <defaults>
</compile_context>

<pallas_src>
import math

import numpy as np
import jax
import jax.numpy as jnp
from jax.experimental import pallas as pl
from jax.experimental.pallas import tpu as pltpu


# --------------------------------- kernel ------------------------------------

def time_embedding_kernel(t_ref, fp_ref, w1_ref, b_ref, w2_ref, out_ref):
    """Fused sinusoid -> lin1 -> swish -> lin2 for one batch block.

    t_ref:   (bb, 1)   f32 timesteps
    fp_ref:  (2, D1)   f32; row0 = [freq, freq], row1 = [0...0, pi/2...pi/2]
    w1_ref:  (D1, C)   bf16 lin1 weight (sin rows then cos rows)
    b_ref:   (2, C)    f32; row0 = b1, row1 = b2
    w2_ref:  (C, C)    bf16 lin2 weight
    out_ref: (bb, C)
    """
    t = t_ref[...].astype(jnp.float32)                        # (bb, 1)
    freq = fp_ref[0:1, :]                                     # (1, D1)
    phase = fp_ref[1:2, :]                                    # (1, D1)

    # cat(sin(a), cos(a)) == sin(a*[f,f] + [0, pi/2]) : one EUP pass, one dot.
    emb = jnp.sin(t * freq + phase)                           # (bb, D1) f32

    h = (jnp.dot(emb.astype(jnp.bfloat16), w1_ref[...],
                 preferred_element_type=jnp.float32)
         + b_ref[0:1, :])                                     # (bb, C) f32
    h = h * jax.nn.sigmoid(h)                                 # Swish (f32, EUP)

    out = (jnp.dot(h.astype(jnp.bfloat16), w2_ref[...],
                   preferred_element_type=jnp.float32)
           + b_ref[1:2, :])                                   # (bb, C) f32
    out_ref[...] = out.astype(out_ref.dtype)


# -------------------------------- wrapper ------------------------------------

def _pick_block_b(B, cap=1024):
    """Whole batch if small; otherwise largest divisor of B <= cap that is a
    multiple of 8 (keeps grid >= 2 for v7x megacore and bounds per-step VMEM)."""
    if B <= cap:
        return B
    for d in range(cap, 7, -1):
        if d % 8 == 0 and B % d == 0:
            return d
    return B   # fallback: single fat block


def time_embedding(t, params, n_channels, *, block_b=None, out_dtype=jnp.float32):
    """t: (B,) float timesteps -> (B, n_channels) embedding."""
    assert n_channels % 8 == 0 and n_channels >= 16, "need half_dim >= 2"
    B = t.shape[0]
    half_dim = n_channels // 8
    d1 = 2 * half_dim                      # lin1 input dim == n_channels // 4

    if block_b is None:
        block_b = _pick_block_b(B)
    assert B % block_b == 0
    assert block_b == B or block_b % 8 == 0, \
        "partial-batch blocks must be a multiple of 8 (sublane alignment)"
    num_steps = B // block_b

    # Host-side constants, packed into one small DMA each.
    emb_const = math.log(10000.0) / (half_dim - 1)
    freq = jnp.exp(jnp.arange(half_dim, dtype=jnp.float32) * -emb_const)
    freq_phase = jnp.stack([
        jnp.concatenate([freq, freq]),
        jnp.concatenate([jnp.zeros((half_dim,), jnp.float32),
                         jnp.full((half_dim,), jnp.pi / 2, jnp.float32)]),
    ])                                                        # (2, d1) f32

    t2d = t.reshape(B, 1).astype(jnp.float32)
    w1 = params["w1"].astype(jnp.bfloat16)                    # (d1, C)
    w2 = params["w2"].astype(jnp.bfloat16)                    # (C, C)
    biases = jnp.stack([params["b1"], params["b2"]]).astype(jnp.float32)  # (2, C)

    def const_spec(arr):
        if num_steps > 1:
            # Grid-invariant block: a single resident buffer is enough.
            return pl.BlockSpec(arr.shape, lambda i: (0, 0),
                                pipeline_mode=pl.Buffered(1))
        return pl.BlockSpec(arr.shape, lambda i: (0, 0))

    out = pl.pallas_call(
        time_embedding_kernel,
        out_shape=jax.ShapeDtypeStruct((B, n_channels), out_dtype),
        grid_spec=pltpu.PrefetchScalarGridSpec(
            num_scalar_prefetch=0,
            grid=(num_steps,),
            in_specs=[
                pl.BlockSpec((block_b, 1), lambda i: (i, 0)),     # t
                const_spec(freq_phase),                           # freq + phase
                const_spec(w1),                                   # lin1 weight
                const_spec(biases),                               # b1 | b2
                const_spec(w2),                                   # lin2 weight
            ],
            out_specs=pl.BlockSpec((block_b, n_channels), lambda i: (i, 0)),
        ),
        compiler_params=pltpu.CompilerParams(
            dimension_semantics=("parallel",)),                   # megacore-friendly
    )(t2d, freq_phase, w1, biases, w2)
    return out


# --------------------------- deterministic params ----------------------------

def init_params(key, n_channels):
    in1 = n_channels // 4
    ks = jax.random.split(key, 4)
    n = lambda k, shape, s: s * jax.random.normal(k, shape, jnp.float32)
    return dict(
        w1=n(ks[0], (in1, n_channels), 1.0 / math.sqrt(in1)),
        b1=n(ks[1], (n_channels,), 0.1),
        w2=n(ks[2], (n_channels, n_channels), 1.0 / math.sqrt(n_channels)),
        b2=n(ks[3], (n_channels,), 0.1),
    )


# ----------------------------- pure-JAX reference ----------------------------

def reference(t, p, n_channels):
    half_dim = n_channels // 8
    emb_const = math.log(10000.0) / (half_dim - 1)
    freq = jnp.exp(jnp.arange(half_dim, dtype=jnp.float32) * -emb_const)
    emb = t[:, None] * freq[None, :]
    emb = jnp.concatenate([jnp.sin(emb), jnp.cos(emb)], axis=1)
    h = emb @ p["w1"] + p["b1"]
    h = h * jax.nn.sigmoid(h)
    return h @ p["w2"] + p["b2"]


# ----------------------------------- main -------------------------------------

if __name__ == "__main__":
    B, N_CHANNELS = 8, 128        # half_dim = 16, lin1 input = 32

    key = jax.random.PRNGKey(0)
    k_t, k_p = jax.random.split(key, 2)
    t = jax.random.uniform(k_t, (B,), jnp.float32, minval=0.0, maxval=100.0)
    params = init_params(k_p, N_CHANNELS)

    out = time_embedding(t, params, N_CHANNELS)
    out = jax.block_until_ready(out)
    assert out.shape == (B, N_CHANNELS)

    ref = reference(t, params, N_CHANNELS)
    # Tolerance reflects bf16 matmul operands vs the pure-f32 reference.
    np.testing.assert_allclose(np.asarray(out), np.asarray(ref),
                               rtol=2e-2, atol=2e-2)

    print("KERNEL_OK")
</pallas_src>

<mosaic_0001>
module attributes {stable_mosaic.version = 11 : i64} {
  func.func @time_embedding_kernel(%arg0: i32, %arg1: memref<8x1xf32, #tpu.memory_space<vmem>>, %arg2: memref<2x32xf32, #tpu.memory_space<vmem>>, %arg3: memref<32x128xbf16, #tpu.memory_space<vmem>>, %arg4: memref<2x128xf32, #tpu.memory_space<vmem>>, %arg5: memref<128x128xbf16, #tpu.memory_space<vmem>>, %arg6: memref<8x128xf32, #tpu.memory_space<vmem>>) attributes {dimension_semantics = [#tpu.dimension_semantics<parallel>], iteration_bounds = array<i64: 1>, scalar_prefetch = 0 : i64, scratch_operands = 0 : i64, tpu.core_type = #tpu.core_type<tc>, window_params = [{transform_indices = @transform_0, window_bounds = array<i64: 8, 1>}, {pipeline_mode = #tpu.pipeline_mode<synchronous>, transform_indices = @transform_1, window_bounds = array<i64: 2, 32>}, {pipeline_mode = #tpu.pipeline_mode<synchronous>, transform_indices = @transform_2, window_bounds = array<i64: 32, 128>}, {pipeline_mode = #tpu.pipeline_mode<synchronous>, transform_indices = @transform_3, window_bounds = array<i64: 2, 128>}, {pipeline_mode = #tpu.pipeline_mode<synchronous>, transform_indices = @transform_4, window_bounds = array<i64: 128, 128>}, {transform_indices = @transform_5, window_bounds = array<i64: 8, 128>}]} {
    %c0 = arith.constant 0 : index
    %c0_0 = arith.constant 0 : index
    %0 = vector.load %arg1[%c0, %c0_0] : memref<8x1xf32, #tpu.memory_space<vmem>>, vector<8x1xf32>
    %c0_1 = arith.constant 0 : index
    %c0_2 = arith.constant 0 : index
    %1 = vector.load %arg2[%c0_1, %c0_2] : memref<2x32xf32, #tpu.memory_space<vmem>>, vector<1x32xf32>
    %c1 = arith.constant 1 : index
    %c0_3 = arith.constant 0 : index
    %2 = vector.load %arg2[%c1, %c0_3] : memref<2x32xf32, #tpu.memory_space<vmem>>, vector<1x32xf32>
    %3 = vector.broadcast %0 : vector<8x1xf32> to vector<8x32xf32>
    %4 = vector.broadcast %1 : vector<1x32xf32> to vector<8x32xf32>
    %5 = arith.mulf %3, %4 : vector<8x32xf32>
    %6 = vector.broadcast %2 : vector<1x32xf32> to vector<8x32xf32>
    %7 = arith.addf %5, %6 : vector<8x32xf32>
    %8 = math.sin %7 : vector<8x32xf32>
    %9 = arith.truncf %8 : vector<8x32xf32> to vector<8x32xbf16>
    %c0_4 = arith.constant 0 : index
    %c0_5 = arith.constant 0 : index
    %10 = vector.load %arg3[%c0_4, %c0_5] : memref<32x128xbf16, #tpu.memory_space<vmem>>, vector<32x128xbf16>
    %cst = arith.constant dense<0.000000e+00> : vector<8x128xf32>
    %11 = tpu.matmul %9, %10, %cst {dimension_numbers = #tpu.dot_dimension_numbers<[1], [0], [0], [1], [0, 0, 1, 1], [], []>} : vector<8x32xbf16>, vector<32x128xbf16>, vector<8x128xf32> -> vector<8x128xf32>
    %c0_6 = arith.constant 0 : index
    %c0_7 = arith.constant 0 : index
    %12 = vector.load %arg4[%c0_6, %c0_7] : memref<2x128xf32, #tpu.memory_space<vmem>>, vector<1x128xf32>
    %13 = vector.broadcast %12 : vector<1x128xf32> to vector<8x128xf32>
    %14 = arith.addf %11, %13 : vector<8x128xf32>
    %15 = arith.negf %14 : vector<8x128xf32>
    %16 = math.exp %15 : vector<8x128xf32>
    %cst_8 = arith.constant 1.000000e+00 : f32
    %17 = vector.broadcast %cst_8 : f32 to vector<8x128xf32>
    %18 = arith.addf %17, %16 : vector<8x128xf32>
    %19 = arith.divf %17, %18 : vector<8x128xf32>
    %20 = arith.mulf %14, %19 : vector<8x128xf32>
    %21 = arith.truncf %20 : vector<8x128xf32> to vector<8x128xbf16>
    %c0_9 = arith.constant 0 : index
    %c0_10 = arith.constant 0 : index
    %22 = vector.load %arg5[%c0_9, %c0_10] : memref<128x128xbf16, #tpu.memory_space<vmem>>, vector<128x128xbf16>
    %cst_11 = arith.constant dense<0.000000e+00> : vector<8x128xf32>
    %23 = tpu.matmul %21, %22, %cst_11 {dimension_numbers = #tpu.dot_dimension_numbers<[1], [0], [0], [1], [0, 0, 1, 1], [], []>} : vector<8x128xbf16>, vector<128x128xbf16>, vector<8x128xf32> -> vector<8x128xf32>
    %c1_12 = arith.constant 1 : index
    %c0_13 = arith.constant 0 : index
    %24 = vector.load %arg4[%c1_12, %c0_13] : memref<2x128xf32, #tpu.memory_space<vmem>>, vector<1x128xf32>
    %25 = vector.broadcast %24 : vector<1x128xf32> to vector<8x128xf32>
    %26 = arith.addf %23, %25 : vector<8x128xf32>
    %c0_14 = arith.constant 0 : index
    %c0_15 = arith.constant 0 : index
    %27 = vector.load %arg6[%c0_14, %c0_15] : memref<8x128xf32, #tpu.memory_space<vmem>>, vector<8x128xf32>
    tpu.vector_store %arg6[%c0_14, %c0_15], %26 {strides = array<i32>} : memref<8x128xf32, #tpu.memory_space<vmem>>, vector<8x128xf32>,
    return
  }
  func.func @transform_0(%arg0: i32) -> (i32, i32) {
    %c0_i32 = arith.constant 0 : i32
    %c0_i32_0 = arith.constant 0 : i32
    return %arg0, %c0_i32 : i32, i32
  }
  func.func @transform_1(%arg0: i32) -> (i32, i32) {
    %c0_i32 = arith.constant 0 : i32
    %c0_i32_0 = arith.constant 0 : i32
    %c0_i32_1 = arith.constant 0 : i32
    return %c0_i32, %c0_i32_0 : i32, i32
  }
  func.func @transform_2(%arg0: i32) -> (i32, i32) {
    %c0_i32 = arith.constant 0 : i32
    %c0_i32_0 = arith.constant 0 : i32
    %c0_i32_1 = arith.constant 0 : i32
    return %c0_i32, %c0_i32_0 : i32, i32
  }
  func.func @transform_3(%arg0: i32) -> (i32, i32) {
    %c0_i32 = arith.constant 0 : i32
    %c0_i32_0 = arith.constant 0 : i32
    %c0_i32_1 = arith.constant 0 : i32
    return %c0_i32, %c0_i32_0 : i32, i32
  }
  func.func @transform_4(%arg0: i32) -> (i32, i32) {
    %c0_i32 = arith.constant 0 : i32
    %c0_i32_0 = arith.constant 0 : i32
    %c0_i32_1 = arith.constant 0 : i32
    return %c0_i32, %c0_i32_0 : i32, i32
  }
  func.func @transform_5(%arg0: i32) -> (i32, i32) {
    %c0_i32 = arith.constant 0 : i32
    %c0_i32_0 = arith.constant 0 : i32
    return %arg0, %c0_i32 : i32, i32
  }
}

</mosaic_0001>

<llo_original>
// kernel: tpu_custom_call.1
$region0: #{tpu_custom_call.1}
  #allocation0 [shape = 'u32[]', space=smem, size = 0x4, offset = 0x4, fixed_abs, tag = 'smem constant byte address 0x4 - core index']
  #allocation1 [shape = 'u32[144,128]{1,0:T(1,128)}', space=vmem, size = 0x12000, scoped, tag = 'internal scratch']
  %s0 = inlined_call_operand.vmem [shape: f32[8,1], index: 0, kind: input, shape index: {}]
  %s1 = inlined_call_operand.vmem [shape: f32[2,32], index: 1, kind: input, shape index: {}]
  %s2 = inlined_call_operand.hbm [shape: bf16[32,128], index: 2, kind: input, shape index: {}]
  %s3 = inlined_call_operand.vmem [shape: f32[2,128], index: 3, kind: input, shape index: {}]
  %s4 = inlined_call_operand.hbm [shape: bf16[128,128], index: 4, kind: input, shape index: {}]
  %s5 = inlined_call_operand.hbm [shape: f32[8,128], index: 5, kind: output, shape index: {}]
  %s6 = sld [smem:[#allocation0]]
  $region38: #{tpu_custom_call.1} parent=0
    _
  %s8 = ssub.s32 1, %s6
  %s9 = scalar_select 0, %s8, %s6
  $region1: #{tpu_custom_call.1} parent=0
    #allocation2 [shape = 'u8[8192]{0}', space=vmem, size = 0x2000, scoped, tag = 'input window, operand 2, single buffered']
    #allocation3 [shape = 's32[1]{0}', space=sflag, size = 0x4, scoped, tag = 'scoped memory for tpu_custom_call.1']
    #allocation4 [shape = 's32[1]{0}', space=sflag, size = 0x4, scoped, tag = 'scoped memory for tpu_custom_call.1']
    #allocation5 [shape = 'u8[32768]{0}', space=vmem, size = 0x8000, scoped, tag = 'input window, operand 4, single buffered']
    #allocation6 [shape = 's32[1]{0}', space=sflag, size = 0x4, scoped, tag = 'scoped memory for tpu_custom_call.1']
    #allocation7 [shape = 'u8[4096]{0}', space=vmem, size = 0x1000, scoped, tag = 'output window, operand 0, single buffered']
    %10 = vsyncpa [#allocation3], 0
    %11 = vsyncpa [#allocation6], 0
    %12 = vsyncpa [#allocation4], 0
    // Predicated region
    $region2: #{tpu_custom_call.1} parent=1 // pred_check
      _
    $region3: #{tpu_custom_call.1} parent=1 // pred_check_branch
      %14 = sbr.rel (0) target = $region5
    $region4: #{tpu_custom_call.1} parent=1 // pred_region
      _
    $region5: #{tpu_custom_call.1} parent=1 // pred_fallthru
      _
    // Predicated region
    $region6: #{tpu_custom_call.1} parent=1 // pred_check
      _
    $region7: #{tpu_custom_call.1} parent=1 // pred_check_branch
      %16 = sbr.rel (0) target = $region9
    $region8: #{tpu_custom_call.1} parent=1 // pred_region
      _
    $region9: #{tpu_custom_call.1} parent=1 // pred_fallthru
      _
    // Predicated region
    $region10: #{tpu_custom_call.1} parent=1 // pred_check
      _
    $region11: #{tpu_custom_call.1} parent=1 // pred_check_branch
      %18 = sbr.rel (0) target = $region13
    $region12: #{tpu_custom_call.1} parent=1 // pred_region
      %s20 = ssub.s32 256, 256
      %21 = vsyncadd [#allocation3], %s20
      %s22 = sshll.u32 [#allocation2], 4
      %s23 = int_to_ptr.vmem [resolvable:$true] %s22
      %28 = dma.hbm_to_vmem [thread:$0]  %s2, 256, %s23, [#allocation3], 64, 64, 4
    $region13: #{tpu_custom_call.1} parent=1 // pred_fallthru
      _
    // Predicated region
    $region14: #{tpu_custom_call.1} parent=1 // pred_check
      _
    $region15: #{tpu_custom_call.1} parent=1 // pred_check_branch
      %30 = sbr.rel (0) target = $region17
    $region16: #{tpu_custom_call.1} parent=1 // pred_region
      _
    $region17: #{tpu_custom_call.1} parent=1 // pred_fallthru
      _
    // Predicated region
    $region18: #{tpu_custom_call.1} parent=1 // pred_check
      _
    $region19: #{tpu_custom_call.1} parent=1 // pred_check_branch
      %32 = sbr.rel (0) target = $region21
    $region20: #{tpu_custom_call.1} parent=1 // pred_region
      %s34 = ssub.s32 1024, 1024
      %35 = vsyncadd [#allocation6], %s34
      %s36 = sshll.u32 [#allocation5], 4
      %s37 = int_to_ptr.vmem [resolvable:$true] %s36
      %42 = dma.hbm_to_vmem [thread:$0]  %s4, 1024, %s37, [#allocation6], 64, 64, 4
    $region21: #{tpu_custom_call.1} parent=1 // pred_fallthru
      _
    // Predicated region
    $region22: #{tpu_custom_call.1} parent=1 // pred_check
      _
    $region23: #{tpu_custom_call.1} parent=1 // pred_check_branch
      %44 = sbr.rel (0) target = $region25
    $region24: #{tpu_custom_call.1} parent=1 // pred_region
      %45 = dma.done [#allocation3], 256
    $region25: #{tpu_custom_call.1} parent=1 // pred_fallthru
      _
    // Predicated region
    $region26: #{tpu_custom_call.1} parent=1 // pred_check
      _
    $region27: #{tpu_custom_call.1} parent=1 // pred_check_branch
      %47 = sbr.rel (0) target = $region29
    $region28: #{tpu_custom_call.1} parent=1 // pred_region
      %48 = dma.done [#allocation6], 1024
    $region29: #{tpu_custom_call.1} parent=1 // pred_fallthru
      _
    %v50 = vld [vmem:[%s0] sm:$0xff]
    %v51 = vld [vmem:[%s1] sm:$0x1]
    %v52 = vld [vmem:[%s1 + $0x1] sm:$0x1]
    %54 = vset.pattern.permute.xlu0 0
    %55 = vperm.xlu0 %54, %v50
    %v56 = vpop.permute.xlu0 %55
    %v58 = vlaneseq
    %v59 = vshrl.u32 %v58, 7
    %v60 = vsub.s32 0, %v59
    %v61 = vrot.slane %v51, %v60
    %v62 = vmul.f32 %v56, %v61
    %v63 = vlaneseq
    %v64 = vshrl.u32 %v63, 7
    %v65 = vsub.s32 0, %v64
    %v66 = vrot.slane %v52, %v65
    %v67 = vadd.f32 %v62, %v66
    %v68 = vand.u32 2147483647, %v67
    %vm69 = vcmp.le.f32.partialorder %v68, 0.7853982
    %vm70 = vcmp.lt.s32.totalorder %v67, 0
    %v71 = vand.u32 %v67, 2139095040
    %v72 = vshrl.u32 %v71, 23
    %v73 = vsub.s32 %v72, 127
    %v74 = vand.u32 2147483647, %v67
    %v75 = vand.u32 %v74, 8388607
    %v76 = vor.u32 %v75, 8388608
    %v77 = vsub.s32 0, %v76
    %v78 = vadd.s32 %v73, 1
    %vm79 = vcmp.gt.s32.totalorder %v78, 0
    %v80 = vsel %vm79, %v78, 0
    %v81 = vshrl.u32 %v80, 5
    %v82 = vand.u32 %v80, 31
    %v83 = vsub.s32 32, %v82
    %v84 = vshrl.u32 683565275, %v83
    %v85 = vshll.u32 683565275, %v82
    %v86 = vshrl.u32 2475754826, %v83
    %v87 = vor.u32 %v85, %v86
    %v88 = vshll.u32 2475754826, %v82
    %v89 = vshrl.u32 2131351028, %v83
    %v90 = vor.u32 %v88, %v89
    %v91 = vshll.u32 2131351028, %v82
    %v92 = vshrl.u32 2102212464, %v83
    %v93 = vor.u32 %v91, %v92
    %v94 = vshll.u32 2102212464, %v82
    %v95 = vshrl.u32 920167782, %v83
    %v96 = vor.u32 %v94, %v95
    %v97 = vshll.u32 920167782, %v82
    %v98 = vshrl.u32 1326507024, %v83
    %v99 = vor.u32 %v97, %v98
    %vm100 = vcmp.lt.s32.totalorder %v81, 1
    %vm101 = vcmp.lt.s32.totalorder %v81, 2
    %vm102 = vcmp.lt.s32.totalorder %v81, 3
    %vm103 = vcmp.lt.s32.totalorder %v81, 4
    %v104 = vsel %vm100, %v84, %v87
    %v105 = vsel %vm103, %v93, 2102212464
    %v106 = vsel %vm102, %v90, %v105
    %v107 = vsel %vm101, %v104, %v106
    %v108 = vsel %vm100, %v87, %v90
    %v109 = vsel %vm103, %v96, 920167782
    %v110 = vsel %vm102, %v93, %v109
    %v111 = vsel %vm101, %v108, %v110
    %v112 = vsel %vm100, %v90, %v93
    %v113 = vsel %vm103, %v99, 1326507024
    %v114 = vsel %vm102, %v96, %v113
    %v115 = vsel %vm101, %v112, %v114
    %v116 = vshll.u32 %v76, 8
    %v117 = vmul.u32.u64.compose %v116, %v115
    %v118 = vextract.low.u32 %v117
    %v119 = vextract.high.u32 %v117
    %v120 = vmul.u32.u64.compose %v116, %v111
    %v121 = vextract.low.u32 %v120
    %v122 = vextract.high.u32 %v120
    %v123 = vmul.u32 %v116, %v107
    %v124 = vadd.s32 %v119, %v121
    %vm125 = vc.u32 %v119, %v121
    %v126 = vadd.s32 %v122, 1
    %v127 = vsel %vm125, %v126, %v122
    %v128 = vadd.s32 %v123, %v127
    %v129 = vadd.s32 %v128, 536870912
    %v130 = vshrl.u32 %v129, 30
    %v131 = vshll.u32 %v130, 30
    %v132 = vsub.s32 %v128, %v131
    %vm133 = vcmp.lt.s32.totalorder %v132, 0
    %v134 = vsub.s32 0, %v132
    %v135 = vsel %vm133, %v134, %v132
    %v136 = vclz %v135
    %v137 = vsub.s32 %v136, 2
    %vm138 = vcmp.gt.s32.totalorder 0, %v137
    %v139 = vsel %vm138, 0, %v137
    %v140 = vsub.s32 32, %v139
    %v141 = vshll.u32 %v132, %v139
    %v142 = vshrl.u32 %v124, %v140
    %v143 = vor.u32 %v141, %v142
    %v144 = vsub.s32 4294967266, %v139
    %v145 = vadd.s32 %v144, 127
    %v146 = vshll.u32 %v145, 23
    %v147 = vor.u32 4788187, %v146
    %v148 = vand.u32 2147483647, %v147
    %v150 = vcvt.s32.f32 %v143
    %v151 = vmul.f32 %v150, %v148
    %v152 = vxor.u32 %v151, 2147483648
    %v153 = vsel %vm70, %v152, %v151
    %v154 = vsub.s32 4, %v130
    %v155 = vsel %vm70, %v154, %v130
    %v156 = vsel %vm69, %v67, %v153
    %v157 = vsel %vm69, 0, %v155
    %v158 = vcosq.f32.pop %v156
    %v159 = vsinq.f32.pop %v156
    %vm160 = vweird.f32 %v67
    %v161 = vadd.s32 %v157, 3
    %v162 = vand.u32 %v161, 3
    %vm163 = vcmp.lt.s32.totalorder %v162, 2
    %vm164 = vcmp.eq.s32.totalorder %v162, 0
    %v165 = vxor.u32 %v159, 2147483648
    %v166 = vsel %vm164, %v158, %v165
    %vm167 = vcmp.eq.s32.totalorder %v162, 2
    %v168 = vxor.u32 %v158, 2147483648
    %v169 = vsel %vm167, %v168, %v159
    %v170 = vsel %vm163, %v166, %v169
    %v171 = vsel %vm160, nan, %v170
    %v172 = vpack.c.bf16 %v171, %v171
    %v173 = vld [vmem:[#allocation2] sm:$0xf]
    %v174 = vld [vmem:[#allocation2 + $0x4] sm:$0xf]
    %v175 = vld [vmem:[#allocation2 + $0x8] sm:$0xf]
    %v176 = vld [vmem:[#allocation2 + $0xc] sm:$0xf]
    %v177 = vld [vmem:[%s3] sm:$0x1]
    %v178 = vlaneseq
    %v179 = vshrl.u32 %v178, 7
    %v180 = vsub.s32 0, %v179
    %v181 = vrot.slane %v177, %v180
    %v186 = vunpack.c.l.b16 %v173
    %v187 = vunpack.c.l.b16 %v174
    %v188 = vunpack.c.l.b16 %v175
    %v189 = vunpack.c.l.b16 %v176
    %v190 = vpack.c.b16 %v187, %v186
    %v191 = vpack.c.b16 %v189, %v188
    %vm194 = vcmask 261120
    %v196 = vsel %vm194, %v172, 0
    %198 = vmatprep.subr.bf16.mxu0 0
    %199 = vmatpush1.bf16.msra.mxu0 0
    %200 = vmatprep.subr.bf16.mxu0 0
    %201 = vmatpush1.bf16.msra.mxu0 0
    %202 = vmatprep.subr.bf16.mxu0 0
    %203 = vmatpush1.bf16.msra.mxu0 0
    %204 = vmatprep.subr.bf16.mxu0 0
    %205 = vmatpush1.bf16.msra.mxu0 0
    %206 = vmatprep.subr.bf16.mxu0 0
    %207 = vmatpush1.bf16.msra.mxu0 0
    %208 = vmatprep.subr.bf16.mxu0 0
    %209 = vmatpush1.bf16.msra.mxu0 0
    %210 = vmatprep.subr.bf16.mxu0 0
    %211 = vmatpush1.bf16.msra.mxu0 %v191
    %212 = vmatprep.subr.bf16.mxu0 0
    %213 = vmatpush1.bf16.msra.mxu0 %v190
    %214 = vmatprep.subr.bf16.mxu0 0
    %215 = vmatpush2.bf16.msra.mxu0 0
    %216 = vmatprep.subr.bf16.mxu0 0
    %217 = vmatpush2.bf16.msra.mxu0 0
    %218 = vmatprep.subr.bf16.mxu0 0
    %219 = vmatpush2.bf16.msra.mxu0 0
    %220 = vmatprep.subr.bf16.mxu0 0
    %221 = vmatpush2.bf16.msra.mxu0 0
    %222 = vmatprep.subr.bf16.mxu0 0
    %223 = vmatpush2.bf16.msra.mxu0 0
    %224 = vmatprep.subr.bf16.mxu0 0
    %225 = vmatpush2.bf16.msra.mxu0 0
    %226 = vmatprep.subr.bf16.mxu0 0
    %227 = vmatpush2.bf16.msra.mxu0 0
    %228 = vmatprep.subr.bf16.mxu0 0
    %229 = vmatpush2.bf16.msra.mxu0 0
    %230 = vmatprep.mubr.bf16.mxu0 0
    %231 = vmatmul.mubr.bf16.gmra.mxu0 %v196
    %v232 = vpop.f32.mrf.mxu0
    %v233 = vadd.f32 %v181, %v232
    %v234 = vpop.f32.mrf.mxu0
    %v235 = vpop.f32.mrf.mxu0
    %v236 = vpop.f32.mrf.mxu0
    %237 = vdwg.mxu0
    %v238 = vxor.u32 %v233, 2147483648
    %v239 = vmul.f32 %v238, 1.442695
    %v240 = vpow.pop %v239
    %v241 = vadd.f32 %v240, 1.0
    %v242 = vrcp.pop %v241
    %v243 = vmul.f32 1.0, %v242
    %v244 = vmul.f32 %v233, %v243
    %v245 = vpack.c.bf16 %v244, %v244
    %v246 = vld [vmem:[#allocation5] sm:$0xf]
    %v247 = vld [vmem:[#allocation5 + $0x4] sm:$0xf]
    %v248 = vld [vmem:[#allocation5 + $0x8] sm:$0xf]
    %v249 = vld [vmem:[#allocation5 + $0xc] sm:$0xf]
    %v250 = vld [vmem:[#allocation5 + $0x10] sm:$0xf]
    %v251 = vld [vmem:[#allocation5 + $0x14] sm:$0xf]
    %v252 = vld [vmem:[#allocation5 + $0x18] sm:$0xf]
    %v253 = vld [vmem:[#allocation5 + $0x1c] sm:$0xf]
    %v254 = vld [vmem:[#allocation5 + $0x20] sm:$0xf]
    %v255 = vld [vmem:[#allocation5 + $0x24] sm:$0xf]
    %v256 = vld [vmem:[#allocation5 + $0x28] sm:$0xf]
    %v257 = vld [vmem:[#allocation5 + $0x2c] sm:$0xf]
    %v258 = vld [vmem:[#allocation5 + $0x30] sm:$0xf]
    %v259 = vld [vmem:[#allocation5 + $0x34] sm:$0xf]
    %v260 = vld [vmem:[#allocation5 + $0x38] sm:$0xf]
    %v261 = vld [vmem:[#allocation5 + $0x3c] sm:$0xf]
    %v262 = vld [vmem:[%s3 + $0x1] sm:$0x1]
    %v263 = vlaneseq
    %v264 = vshrl.u32 %v263, 7
    %v265 = vsub.s32 0, %v264
    %v266 = vrot.slane %v262, %v265
    %v283 = vunpack.c.l.b16 %v246
    %v284 = vunpack.c.l.b16 %v247
    %v285 = vunpack.c.l.b16 %v248
    %v286 = vunpack.c.l.b16 %v249
    %v287 = vunpack.c.l.b16 %v250
    %v288 = vunpack.c.l.b16 %v251
    %v289 = vunpack.c.l.b16 %v252
    %v290 = vunpack.c.l.b16 %v253
    %v291 = vunpack.c.l.b16 %v254
    %v292 = vunpack.c.l.b16 %v255
    %v293 = vunpack.c.l.b16 %v256
    %v294 = vunpack.c.l.b16 %v257
    %v295 = vunpack.c.l.b16 %v258
    %v296 = vunpack.c.l.b16 %v259
    %v297 = vunpack.c.l.b16 %v260
    %v298 = vunpack.c.l.b16 %v261
    %v299 = vpack.c.b16 %v284, %v283
    %v300 = vpack.c.b16 %v286, %v285
    %v301 = vpack.c.b16 %v288, %v287
    %v302 = vpack.c.b16 %v290, %v289
    %v303 = vpack.c.b16 %v292, %v291
    %v304 = vpack.c.b16 %v294, %v293
    %v305 = vpack.c.b16 %v296, %v295
    %v306 = vpack.c.b16 %v298, %v297
    %315 = vmatprep.subr.bf16.mxu0 0
    %316 = vmatpush1.bf16.msra.mxu0 %v306
    %317 = vmatprep.subr.bf16.mxu0 0
    %318 = vmatpush1.bf16.msra.mxu0 %v305
    %319 = vmatprep.subr.bf16.mxu0 0
    %320 = vmatpush1.bf16.msra.mxu0 %v304
    %321 = vmatprep.subr.bf16.mxu0 0
    %322 = vmatpush1.bf16.msra.mxu0 %v303
    %323 = vmatprep.subr.bf16.mxu0 0
    %324 = vmatpush1.bf16.msra.mxu0 %v302
    %325 = vmatprep.subr.bf16.mxu0 0
    %326 = vmatpush1.bf16.msra.mxu0 %v301
    %327 = vmatprep.subr.bf16.mxu0 0
    %328 = vmatpush1.bf16.msra.mxu0 %v300
    %329 = vmatprep.subr.bf16.mxu0 0
    %330 = vmatpush1.bf16.msra.mxu0 %v299
    %331 = vmatprep.subr.bf16.mxu0 0
    %332 = vmatpush2.bf16.msra.mxu0 0
    %333 = vmatprep.subr.bf16.mxu0 0
    %334 = vmatpush2.bf16.msra.mxu0 0
    %335 = vmatprep.subr.bf16.mxu0 0
    %336 = vmatpush2.bf16.msra.mxu0 0
    %337 = vmatprep.subr.bf16.mxu0 0
    %338 = vmatpush2.bf16.msra.mxu0 0
    %339 = vmatprep.subr.bf16.mxu0 0
    %340 = vmatpush2.bf16.msra.mxu0 0
    %341 = vmatprep.subr.bf16.mxu0 0
    %342 = vmatpush2.bf16.msra.mxu0 0
    %343 = vmatprep.subr.bf16.mxu0 0
    %344 = vmatpush2.bf16.msra.mxu0 0
    %345 = vmatprep.subr.bf16.mxu0 0
    %346 = vmatpush2.bf16.msra.mxu0 0
    %347 = vmatprep.mubr.bf16.mxu0 0
    %348 = vmatmul.mubr.bf16.gmra.mxu0 %v245
    %v349 = vpop.f32.mrf.mxu0
    %v350 = vadd.f32 %v266, %v349
    %v351 = vpop.f32.mrf.mxu0
    %v352 = vpop.f32.mrf.mxu0
    %v353 = vpop.f32.mrf.mxu0
    %354 = vdwg.mxu0
    %355 = vst [vmem:[#allocation7] sm:$0xff] %v350
    // Predicated region
    $region30: #{tpu_custom_call.1} parent=1 // pred_check
      _
    $region31: #{tpu_custom_call.1} parent=1 // pred_check_branch
      %357 = sbr.rel (0) target = $region33
    $region32: #{tpu_custom_call.1} parent=1 // pred_region
      %s359 = ssub.s32 128, 128
      %360 = vsyncadd [#allocation4], %s359
      %s362 = sshll.u32 [#allocation7], 4
      %s363 = int_to_ptr.vmem [resolvable:$true] %s362
      %365 = dma.vmem_to_hbm [thread:$0]  %s363, 128, %s5, [#allocation4]
    $region33: #{tpu_custom_call.1} parent=1 // pred_fallthru
      _
    // Predicated region
    $region34: #{tpu_custom_call.1} parent=1 // pred_check
      _
    $region35: #{tpu_custom_call.1} parent=1 // pred_check_branch
      %367 = sbr.rel (0) target = $region37
    $region36: #{tpu_custom_call.1} parent=1 // pred_region
      %368 = dma.done [#allocation4], 128
    $region37: #{tpu_custom_call.1} parent=1 // pred_fallthru
      _
    %369 = vsyncpa [#allocation3], 1
    %370 = vsyncpa [#allocation6], 1
    %371 = vsyncpa [#allocation4], 1

</llo_original>
